<compile_context>
chip_gen: v7x
topology: tpu7x:2x2x1
jax: 0.10.0
libtpu: 0.0.40
codegen_flags: <defaults>
</compile_context>

<pallas_src>
import math

import jax
import jax.numpy as jnp
from jax.experimental import pallas as pl
from jax.experimental.pallas import tpu as pltpu


# --------------------------------------------------------------------------- #
# Model hyper-parameters (small, synthetic)
# --------------------------------------------------------------------------- #
DIM = 32                 # model dim
N_HEADS = 2
Q_LORA_RANK = 16
KV_LORA_RANK = 16
QK_NOPE_HEAD_DIM = 16
QK_ROPE_HEAD_DIM = 8
QK_HEAD_DIM = QK_NOPE_HEAD_DIM + QK_ROPE_HEAD_DIM   # 24
V_HEAD_DIM = 16
RMS_EPS = 1e-6
SOFTMAX_SCALE = QK_HEAD_DIM ** -0.5

# Weight-slab layout (bf16, 128 rows x 128 lanes). Row offsets are multiples of
# 16 (the bf16 sublane tile), all lane ranges start at 0.
SLAB_ROWS = 128
SLAB_LANES = 128
R_WQA = 0                                   # (DIM, Q_LORA_RANK)        rows   0:32
R_WQB = 32                                  # (Q_LORA_RANK, H*QK)       rows  32:48
R_WKVA = 48                                 # (DIM, KV_R + ROPE)        rows  48:80
R_WKVB = 80                                 # (KV_R, H*(NOPE+V))        rows  80:96
R_WO = 96                                   # (H*V, DIM)                rows  96:128


# --------------------------------------------------------------------------- #
# Fused Pallas kernel: single invocation, everything VMEM-resident
# --------------------------------------------------------------------------- #
def _rmsnorm_f32(x):
    """RMSNorm (no elementwise weight -- it is folded into the next projection)."""
    return x * jax.lax.rsqrt(jnp.mean(x * x, axis=-1, keepdims=True) + RMS_EPS)


def _mla_fused_kernel(x_ref, bias_ref, w_ref, o_ref):
    x = x_ref[...]                                             # (B*S, DIM) bf16

    # Carve the packed weight slab with static slices (no extra DMAs).
    wqa = w_ref[R_WQA:R_WQA + DIM, 0:Q_LORA_RANK]
    wqb = w_ref[R_WQB:R_WQB + Q_LORA_RANK, 0:N_HEADS * QK_HEAD_DIM]
    wkva = w_ref[R_WKVA:R_WKVA + DIM, 0:KV_LORA_RANK + QK_ROPE_HEAD_DIM]
    wkvb = w_ref[R_WKVB:R_WKVB + KV_LORA_RANK,
                 0:N_HEADS * (QK_NOPE_HEAD_DIM + V_HEAD_DIM)]
    wo = w_ref[R_WO:R_WO + N_HEADS * V_HEAD_DIM, 0:DIM]

    # --- q path: wq_b(q_norm(wq_a(x))), norm weight folded into wq_b ---
    q_a = jnp.dot(x, wqa, preferred_element_type=jnp.float32)
    q_a = _rmsnorm_f32(q_a).astype(jnp.bfloat16)               # single f32->bf16 cast
    q = jnp.dot(q_a, wqb, preferred_element_type=jnp.float32)
    q = (q * SOFTMAX_SCALE).astype(jnp.bfloat16)               # scale folded into q once

    # --- kv path: wkv_a(x) -> split -> rmsnorm -> wkv_b (norm folded) ---
    kv_a = jnp.dot(x, wkva, preferred_element_type=jnp.float32)
    kv_lat = _rmsnorm_f32(kv_a[:, :KV_LORA_RANK]).astype(jnp.bfloat16)
    k_pe = kv_a[:, KV_LORA_RANK:].astype(jnp.bfloat16)          # zero-angle rotary == identity
    kvb = jnp.dot(kv_lat, wkvb,
                  preferred_element_type=jnp.float32).astype(jnp.bfloat16)

    # --- attention, heads statically unrolled; one qk push + one pv push per head ---
    attn_heads = []
    for h in range(N_HEADS):
        q_h = q[:, h * QK_HEAD_DIM:(h + 1) * QK_HEAD_DIM]                       # (M, 24)
        c = h * (QK_NOPE_HEAD_DIM + V_HEAD_DIM)
        k_h = jnp.concatenate([kvb[:, c:c + QK_NOPE_HEAD_DIM], k_pe], axis=-1)  # (M, 24)
        v_h = kvb[:, c + QK_NOPE_HEAD_DIM:c + QK_NOPE_HEAD_DIM + V_HEAD_DIM]    # (M, 16)

        scores = jax.lax.dot_general(
            q_h, k_h, dimension_numbers=(((1,), (1,)), ((), ())),
            preferred_element_type=jnp.float32)                 # (M, M) f32
        scores = scores + bias_ref[h]                           # f32 bias: key mask + cross-batch block mask
        probs = jax.nn.softmax(scores, axis=-1).astype(jnp.bfloat16)
        attn_heads.append(jnp.dot(probs, v_h,
                                  preferred_element_type=jnp.float32).astype(jnp.bfloat16))

    attn = jnp.concatenate(attn_heads, axis=-1)                 # (M, H*V) -- single wo push
    out = jnp.dot(attn, wo, preferred_element_type=jnp.float32)
    # bf16 Linear output, then wrapper's .to(float32)
    o_ref[...] = out.astype(jnp.bfloat16).astype(jnp.float32)


# --------------------------------------------------------------------------- #
# Host-side glue: params, weight packing, mask handling, fused forward call
# --------------------------------------------------------------------------- #
def _pack_weight_slab(wq_a, q_norm, wq_b, wkv_a, kv_norm, wkv_b, wo):
    """Fold RMSNorm weights into the following projection and pack everything
    into one (128, 128) bf16 slab (single DMA)."""
    wq_b_f = (q_norm.astype(jnp.float32)[:, None]
              * wq_b.astype(jnp.float32)).astype(jnp.bfloat16)
    wkv_b_f = (kv_norm.astype(jnp.float32)[:, None]
               * wkv_b.astype(jnp.float32)).astype(jnp.bfloat16)
    slab = jnp.zeros((SLAB_ROWS, SLAB_LANES), jnp.bfloat16)
    slab = slab.at[R_WQA:R_WQA + DIM, :Q_LORA_RANK].set(wq_a)
    slab = slab.at[R_WQB:R_WQB + Q_LORA_RANK, :N_HEADS * QK_HEAD_DIM].set(wq_b_f)
    slab = slab.at[R_WKVA:R_WKVA + DIM, :KV_LORA_RANK + QK_ROPE_HEAD_DIM].set(wkv_a)
    slab = slab.at[R_WKVB:R_WKVB + KV_LORA_RANK,
                   :N_HEADS * (QK_NOPE_HEAD_DIM + V_HEAD_DIM)].set(wkv_b_f)
    slab = slab.at[R_WO:R_WO + N_HEADS * V_HEAD_DIM, :DIM].set(wo)
    return slab


def init_params(key):
    ks = jax.random.split(key, 5)

    def lin(k, fan_in, fan_out):
        return (jax.random.normal(k, (fan_in, fan_out), jnp.float32)
                / math.sqrt(fan_in)).astype(jnp.bfloat16)

    p = {
        "wq_a": lin(ks[0], DIM, Q_LORA_RANK),
        "q_norm": jnp.ones((Q_LORA_RANK,), jnp.bfloat16),
        "wq_b": lin(ks[1], Q_LORA_RANK, N_HEADS * QK_HEAD_DIM),
        "wkv_a": lin(ks[2], DIM, KV_LORA_RANK + QK_ROPE_HEAD_DIM),
        "kv_norm": jnp.ones((KV_LORA_RANK,), jnp.bfloat16),
        "wkv_b": lin(ks[3], KV_LORA_RANK, N_HEADS * (QK_NOPE_HEAD_DIM + V_HEAD_DIM)),
        "wo": lin(ks[4], N_HEADS * V_HEAD_DIM, DIM),
    }
    p["w_slab"] = _pack_weight_slab(p["wq_a"], p["q_norm"], p["wq_b"],
                                    p["wkv_a"], p["kv_norm"], p["wkv_b"], p["wo"])
    return p


def _key_bias_from_mask(attention_mask, B, S):
    """Wrapper semantics: mask -> expand over heads -> [:, :, 0, :] per-key bias (f32)."""
    if attention_mask is None:
        return jnp.zeros((B, N_HEADS, S), jnp.float32)
    m = attention_mask
    if m.ndim == 2:
        m = m[:, None, None, :]
    m = jnp.broadcast_to(m, (B, N_HEADS, m.shape[2], m.shape[3]))
    return m[:, :, 0, :].astype(jnp.float32)          # keep bias in f32 end-to-end


def mla_wrapper_forward(params, hidden_states, attention_mask=None):
    """Matches MLAWrapper.forward: returns (output_f32, None, None)."""
    x = hidden_states.astype(jnp.bfloat16)
    B, S, _ = x.shape
    M = B * S

    key_bias = _key_bias_from_mask(attention_mask, B, S)        # (B, H, S) f32

    # Fold batch into sublanes: (H, B*S, B*S) additive bias where cross-batch
    # score entries are masked with a large negative (softmax weight == 0).
    NEG = jnp.float32(-1e30)
    same_batch = (jnp.arange(M)[:, None] // S) == (jnp.arange(M)[None, :] // S)
    key_bias_flat = jnp.transpose(key_bias, (1, 0, 2)).reshape(N_HEADS, 1, M)
    bias_full = jnp.where(same_batch[None, :, :], key_bias_flat, NEG)  # (H, M, M) f32

    x_flat = x.reshape(M, DIM)                                   # contiguous reshape, free

    vmem = pl.BlockSpec(memory_space=pltpu.MemorySpace.VMEM)
    out_flat = pl.pallas_call(
        _mla_fused_kernel,
        out_shape=jax.ShapeDtypeStruct((M, DIM), jnp.float32),
        in_specs=[vmem, vmem, vmem],
        out_specs=vmem,
        cost_estimate=pl.CostEstimate(flops=180_000, transcendentals=600,
                                      bytes_accessed=40_000),
    )(x_flat, bias_full, params["w_slab"])

    return out_flat.reshape(B, S, DIM), None, None


# --------------------------------------------------------------------------- #
# Pure-JAX reference (natural per-batch formulation of the module forward)
# --------------------------------------------------------------------------- #
def mla_reference(p, hidden_states, attention_mask=None):
    x = hidden_states.astype(jnp.bfloat16)
    B, S, _ = x.shape
    key_bias = _key_bias_from_mask(attention_mask, B, S)

    def rms(v):
        return v * jax.lax.rsqrt(jnp.mean(v * v, axis=-1, keepdims=True) + RMS_EPS)

    outs = []
    for b in range(B):
        xb = x[b]
        q_a = jnp.dot(xb, p["wq_a"], preferred_element_type=jnp.float32)
        q_a = rms(q_a) * p["q_norm"].astype(jnp.float32)
        q = jnp.dot(q_a.astype(jnp.bfloat16), p["wq_b"], preferred_element_type=jnp.float32)
        q = (q * SOFTMAX_SCALE).astype(jnp.bfloat16)

        kv_a = jnp.dot(xb, p["wkv_a"], preferred_element_type=jnp.float32)
        kv_lat = rms(kv_a[:, :KV_LORA_RANK]) * p["kv_norm"].astype(jnp.float32)
        k_pe = kv_a[:, KV_LORA_RANK:].astype(jnp.bfloat16)
        kvb = jnp.dot(kv_lat.astype(jnp.bfloat16), p["wkv_b"],
                      preferred_element_type=jnp.float32).astype(jnp.bfloat16)

        heads = []
        for h in range(N_HEADS):
            q_h = q[:, h * QK_HEAD_DIM:(h + 1) * QK_HEAD_DIM]
            c = h * (QK_NOPE_HEAD_DIM + V_HEAD_DIM)
            k_h = jnp.concatenate([kvb[:, c:c + QK_NOPE_HEAD_DIM], k_pe], axis=-1)
            v_h = kvb[:, c + QK_NOPE_HEAD_DIM:c + QK_NOPE_HEAD_DIM + V_HEAD_DIM]
            s_ = jnp.dot(q_h, k_h.T, preferred_element_type=jnp.float32)
            s_ = s_ + key_bias[b, h][None, :]
            pr = jax.nn.softmax(s_, axis=-1).astype(jnp.bfloat16)
            heads.append(jnp.dot(pr, v_h, preferred_element_type=jnp.float32).astype(jnp.bfloat16))
        attn = jnp.concatenate(heads, axis=-1)
        ob = jnp.dot(attn, p["wo"], preferred_element_type=jnp.float32)
        outs.append(ob.astype(jnp.bfloat16).astype(jnp.float32))
    return jnp.stack(outs, axis=0)


# --------------------------------------------------------------------------- #
# Main
# --------------------------------------------------------------------------- #
if __name__ == "__main__":
    key = jax.random.PRNGKey(0)
    k_param, k_x = jax.random.split(key)

    params = init_params(k_param)

    B, S = 2, 8
    hidden_states = jax.random.normal(k_x, (B, S, DIM), jnp.float32)
    # additive 2-D attention mask (0 = keep, large negative = masked key)
    attention_mask = jnp.zeros((B, S), jnp.float32).at[0, -1].set(-1e9)

    out, _, _ = mla_wrapper_forward(params, hidden_states, attention_mask)
    out = jax.block_until_ready(out)

    ref = jax.block_until_ready(mla_reference(params, hidden_states, attention_mask))

    assert out.shape == (B, S, DIM) and out.dtype == jnp.float32
    assert bool(jnp.all(jnp.isfinite(out)))
    assert bool(jnp.allclose(out, ref, atol=1e-2, rtol=1e-2)), \
        float(jnp.max(jnp.abs(out - ref)))
    print("KERNEL_OK")
</pallas_src>

<mosaic_0001>
module attributes {stable_mosaic.version = 11 : i64} {
  func.func @_mla_fused_kernel(%arg0: memref<16x32xbf16, #tpu.memory_space<vmem>>, %arg1: memref<2x16x16xf32, #tpu.memory_space<vmem>>, %arg2: memref<128x128xbf16, #tpu.memory_space<vmem>>, %arg3: memref<16x32xf32, #tpu.memory_space<vmem>>) attributes {dimension_semantics = [], scalar_prefetch = 0 : i64, scratch_operands = 0 : i64, tpu.core_type = #tpu.core_type<tc>} {
    %c0 = arith.constant 0 : index
    %c0_0 = arith.constant 0 : index
    %0 = vector.load %arg0[%c0, %c0_0] : memref<16x32xbf16, #tpu.memory_space<vmem>>, vector<16x32xbf16>
    %c0_1 = arith.constant 0 : index
    %c0_2 = arith.constant 0 : index
    %1 = vector.load %arg2[%c0_1, %c0_2] : memref<128x128xbf16, #tpu.memory_space<vmem>>, vector<32x16xbf16>
    %c32 = arith.constant 32 : index
    %c0_3 = arith.constant 0 : index
    %2 = vector.load %arg2[%c32, %c0_3] : memref<128x128xbf16, #tpu.memory_space<vmem>>, vector<16x48xbf16>
    %c48 = arith.constant 48 : index
    %c0_4 = arith.constant 0 : index
    %3 = vector.load %arg2[%c48, %c0_4] : memref<128x128xbf16, #tpu.memory_space<vmem>>, vector<32x24xbf16>
    %c80 = arith.constant 80 : index
    %c0_5 = arith.constant 0 : index
    %4 = vector.load %arg2[%c80, %c0_5] : memref<128x128xbf16, #tpu.memory_space<vmem>>, vector<16x64xbf16>
    %c96 = arith.constant 96 : index
    %c0_6 = arith.constant 0 : index
    %5 = vector.load %arg2[%c96, %c0_6] : memref<128x128xbf16, #tpu.memory_space<vmem>>, vector<32x32xbf16>
    %cst = arith.constant dense<0.000000e+00> : vector<16x16xf32>
    %6 = tpu.matmul %0, %1, %cst {dimension_numbers = #tpu.dot_dimension_numbers<[1], [0], [0], [1], [0, 0, 1, 1], [], []>} : vector<16x32xbf16>, vector<32x16xbf16>, vector<16x16xf32> -> vector<16x16xf32>
    %7 = arith.mulf %6, %6 : vector<16x16xf32>
    %cst_7 = arith.constant dense<0.000000e+00> : vector<16xf32>
    %8 = vector.multi_reduction <add>, %7, %cst_7 [1] : vector<16x16xf32> to vector<16xf32>
    %9 = vector.shape_cast %8 : vector<16xf32> to vector<16x1xf32>
    %cst_8 = arith.constant 1.600000e+01 : f32
    %10 = vector.broadcast %cst_8 : f32 to vector<16x1xf32>
    %11 = arith.divf %9, %10 : vector<16x1xf32>
    %cst_9 = arith.constant 9.99999997E-7 : f32
    %12 = vector.broadcast %cst_9 : f32 to vector<16x1xf32>
    %13 = arith.addf %11, %12 : vector<16x1xf32>
    %14 = math.rsqrt %13 : vector<16x1xf32>
    %15 = vector.broadcast %14 : vector<16x1xf32> to vector<16x16xf32>
    %16 = arith.mulf %6, %15 : vector<16x16xf32>
    %17 = arith.truncf %16 : vector<16x16xf32> to vector<16x16xbf16>
    %cst_10 = arith.constant dense<0.000000e+00> : vector<16x48xf32>
    %18 = tpu.matmul %17, %2, %cst_10 {dimension_numbers = #tpu.dot_dimension_numbers<[1], [0], [0], [1], [0, 0, 1, 1], [], []>} : vector<16x16xbf16>, vector<16x48xbf16>, vector<16x48xf32> -> vector<16x48xf32>
    %cst_11 = arith.constant 0.204124153 : f32
    %19 = vector.broadcast %cst_11 : f32 to vector<16x48xf32>
    %20 = arith.mulf %18, %19 : vector<16x48xf32>
    %21 = arith.truncf %20 : vector<16x48xf32> to vector<16x48xbf16>
    %cst_12 = arith.constant dense<0.000000e+00> : vector<16x24xf32>
    %22 = tpu.matmul %0, %3, %cst_12 {dimension_numbers = #tpu.dot_dimension_numbers<[1], [0], [0], [1], [0, 0, 1, 1], [], []>} : vector<16x32xbf16>, vector<32x24xbf16>, vector<16x24xf32> -> vector<16x24xf32>
    %23 = vector.extract_strided_slice %22 {offsets = [0, 0], sizes = [16, 16], strides = [1, 1]} : vector<16x24xf32> to vector<16x16xf32>
    %24 = arith.mulf %23, %23 : vector<16x16xf32>
    %cst_13 = arith.constant dense<0.000000e+00> : vector<16xf32>
    %25 = vector.multi_reduction <add>, %24, %cst_13 [1] : vector<16x16xf32> to vector<16xf32>
    %26 = vector.shape_cast %25 : vector<16xf32> to vector<16x1xf32>
    %cst_14 = arith.constant 1.600000e+01 : f32
    %27 = vector.broadcast %cst_14 : f32 to vector<16x1xf32>
    %28 = arith.divf %26, %27 : vector<16x1xf32>
    %cst_15 = arith.constant 9.99999997E-7 : f32
    %29 = vector.broadcast %cst_15 : f32 to vector<16x1xf32>
    %30 = arith.addf %28, %29 : vector<16x1xf32>
    %31 = math.rsqrt %30 : vector<16x1xf32>
    %32 = vector.broadcast %31 : vector<16x1xf32> to vector<16x16xf32>
    %33 = arith.mulf %23, %32 : vector<16x16xf32>
    %34 = arith.truncf %33 : vector<16x16xf32> to vector<16x16xbf16>
    %35 = vector.extract_strided_slice %22 {offsets = [0, 16], sizes = [16, 8], strides = [1, 1]} : vector<16x24xf32> to vector<16x8xf32>
    %36 = arith.truncf %35 : vector<16x8xf32> to vector<16x8xbf16>
    %cst_16 = arith.constant dense<0.000000e+00> : vector<16x64xf32>
    %37 = tpu.matmul %34, %4, %cst_16 {dimension_numbers = #tpu.dot_dimension_numbers<[1], [0], [0], [1], [0, 0, 1, 1], [], []>} : vector<16x16xbf16>, vector<16x64xbf16>, vector<16x64xf32> -> vector<16x64xf32>
    %38 = arith.truncf %37 : vector<16x64xf32> to vector<16x64xbf16>
    %39 = vector.extract_strided_slice %21 {offsets = [0, 0], sizes = [16, 24], strides = [1, 1]} : vector<16x48xbf16> to vector<16x24xbf16>
    %40 = vector.extract_strided_slice %38 {offsets = [0, 0], sizes = [16, 16], strides = [1, 1]} : vector<16x64xbf16> to vector<16x16xbf16>
    %41 = tpu.concatenate %40, %36 in 1 : vector<16x16xbf16>, vector<16x8xbf16> -> vector<16x24xbf16>
    %42 = vector.extract_strided_slice %38 {offsets = [0, 16], sizes = [16, 16], strides = [1, 1]} : vector<16x64xbf16> to vector<16x16xbf16>
    %cst_17 = arith.constant dense<0.000000e+00> : vector<16x16xf32>
    %43 = tpu.matmul %39, %41, %cst_17 {dimension_numbers = #tpu.dot_dimension_numbers<[1], [1], [0], [0], [0, 0, 1, 0], [], []>} : vector<16x24xbf16>, vector<16x24xbf16>, vector<16x16xf32> -> vector<16x16xf32>
    %c0_18 = arith.constant 0 : index
    %c0_19 = arith.constant 0 : index
    %c0_20 = arith.constant 0 : index
    %44 = vector.load %arg1[%c0_18, %c0_19, %c0_20] : memref<2x16x16xf32, #tpu.memory_space<vmem>>, vector<1x16x16xf32>
    %45 = vector.shape_cast %44 : vector<1x16x16xf32> to vector<16x16xf32>
    %46 = arith.addf %43, %45 : vector<16x16xf32>
    %cst_21 = arith.constant dense<0xFF800000> : vector<16xf32>
    %47 = vector.multi_reduction <maximumf>, %46, %cst_21 [1] : vector<16x16xf32> to vector<16xf32>
    %cst_22 = arith.constant 0xFF800000 : f32
    %48 = vector.broadcast %cst_22 : f32 to vector<16xf32>
    %49 = arith.maximumf %48, %47 : vector<16xf32>
    %50 = vector.shape_cast %49 : vector<16xf32> to vector<16x1xf32>
    %51 = vector.broadcast %50 : vector<16x1xf32> to vector<16x16xf32>
    %52 = arith.subf %46, %51 : vector<16x16xf32>
    %53 = math.exp %52 : vector<16x16xf32>
    %cst_23 = arith.constant dense<0.000000e+00> : vector<16xf32>
    %54 = vector.multi_reduction <add>, %53, %cst_23 [1] : vector<16x16xf32> to vector<16xf32>
    %55 = vector.shape_cast %54 : vector<16xf32> to vector<16x1xf32>
    %56 = vector.broadcast %55 : vector<16x1xf32> to vector<16x16xf32>
    %57 = arith.divf %53, %56 : vector<16x16xf32>
    %58 = arith.truncf %57 : vector<16x16xf32> to vector<16x16xbf16>
    %cst_24 = arith.constant dense<0.000000e+00> : vector<16x16xf32>
    %59 = tpu.matmul %58, %42, %cst_24 {dimension_numbers = #tpu.dot_dimension_numbers<[1], [0], [0], [1], [0, 0, 1, 1], [], []>} : vector<16x16xbf16>, vector<16x16xbf16>, vector<16x16xf32> -> vector<16x16xf32>
    %60 = arith.truncf %59 : vector<16x16xf32> to vector<16x16xbf16>
    %61 = vector.extract_strided_slice %21 {offsets = [0, 24], sizes = [16, 24], strides = [1, 1]} : vector<16x48xbf16> to vector<16x24xbf16>
    %62 = vector.extract_strided_slice %38 {offsets = [0, 32], sizes = [16, 16], strides = [1, 1]} : vector<16x64xbf16> to vector<16x16xbf16>
    %63 = tpu.concatenate %62, %36 in 1 : vector<16x16xbf16>, vector<16x8xbf16> -> vector<16x24xbf16>
    %64 = vector.extract_strided_slice %38 {offsets = [0, 48], sizes = [16, 16], strides = [1, 1]} : vector<16x64xbf16> to vector<16x16xbf16>
    %cst_25 = arith.constant dense<0.000000e+00> : vector<16x16xf32>
    %65 = tpu.matmul %61, %63, %cst_25 {dimension_numbers = #tpu.dot_dimension_numbers<[1], [1], [0], [0], [0, 0, 1, 0], [], []>} : vector<16x24xbf16>, vector<16x24xbf16>, vector<16x16xf32> -> vector<16x16xf32>
    %c1 = arith.constant 1 : index
    %c0_26 = arith.constant 0 : index
    %c0_27 = arith.constant 0 : index
    %66 = vector.load %arg1[%c1, %c0_26, %c0_27] : memref<2x16x16xf32, #tpu.memory_space<vmem>>, vector<1x16x16xf32>
    %67 = vector.shape_cast %66 : vector<1x16x16xf32> to vector<16x16xf32>
    %68 = arith.addf %65, %67 : vector<16x16xf32>
    %cst_28 = arith.constant dense<0xFF800000> : vector<16xf32>
    %69 = vector.multi_reduction <maximumf>, %68, %cst_28 [1] : vector<16x16xf32> to vector<16xf32>
    %cst_29 = arith.constant 0xFF800000 : f32
    %70 = vector.broadcast %cst_29 : f32 to vector<16xf32>
    %71 = arith.maximumf %70, %69 : vector<16xf32>
    %72 = vector.shape_cast %71 : vector<16xf32> to vector<16x1xf32>
    %73 = vector.broadcast %72 : vector<16x1xf32> to vector<16x16xf32>
    %74 = arith.subf %68, %73 : vector<16x16xf32>
    %75 = math.exp %74 : vector<16x16xf32>
    %cst_30 = arith.constant dense<0.000000e+00> : vector<16xf32>
    %76 = vector.multi_reduction <add>, %75, %cst_30 [1] : vector<16x16xf32> to vector<16xf32>
    %77 = vector.shape_cast %76 : vector<16xf32> to vector<16x1xf32>
    %78 = vector.broadcast %77 : vector<16x1xf32> to vector<16x16xf32>
    %79 = arith.divf %75, %78 : vector<16x16xf32>
    %80 = arith.truncf %79 : vector<16x16xf32> to vector<16x16xbf16>
    %cst_31 = arith.constant dense<0.000000e+00> : vector<16x16xf32>
    %81 = tpu.matmul %80, %64, %cst_31 {dimension_numbers = #tpu.dot_dimension_numbers<[1], [0], [0], [1], [0, 0, 1, 1], [], []>} : vector<16x16xbf16>, vector<16x16xbf16>, vector<16x16xf32> -> vector<16x16xf32>
    %82 = arith.truncf %81 : vector<16x16xf32> to vector<16x16xbf16>
    %83 = tpu.concatenate %60, %82 in 1 : vector<16x16xbf16>, vector<16x16xbf16> -> vector<16x32xbf16>
    %cst_32 = arith.constant dense<0.000000e+00> : vector<16x32xf32>
    %84 = tpu.matmul %83, %5, %cst_32 {dimension_numbers = #tpu.dot_dimension_numbers<[1], [0], [0], [1], [0, 0, 1, 1], [], []>} : vector<16x32xbf16>, vector<32x32xbf16>, vector<16x32xf32> -> vector<16x32xf32>
    %85 = arith.truncf %84 : vector<16x32xf32> to vector<16x32xbf16>
    %86 = arith.extf %85 : vector<16x32xbf16> to vector<16x32xf32>
    %c0_33 = arith.constant 0 : index
    %c0_34 = arith.constant 0 : index
    %87 = vector.load %arg3[%c0_33, %c0_34] : memref<16x32xf32, #tpu.memory_space<vmem>>, vector<16x32xf32>
    tpu.vector_store %arg3[%c0_33, %c0_34], %86 {strides = array<i32>} : memref<16x32xf32, #tpu.memory_space<vmem>>, vector<16x32xf32>,
    return
  }
}

</mosaic_0001>

<llo_original>
// kernel: tpu_custom_call.1
$region0: #{tpu_custom_call.1}
  #allocation0 [shape = 'u32[]', space=smem, size = 0x4, offset = 0x4, fixed_abs, tag = 'smem constant byte address 0x4 - core index']
  #allocation1 [shape = 'u32[144,128]{1,0:T(1,128)}', space=vmem, size = 0x12000, scoped, tag = 'internal scratch']
  %s0 = inlined_call_operand.hbm [shape: bf16[16,32], index: 0, kind: input, shape index: {}]
  %s1 = inlined_call_operand.hbm [shape: f32[2,16,16], index: 1, kind: input, shape index: {}]
  %s2 = inlined_call_operand.hbm [shape: bf16[128,128], index: 2, kind: input, shape index: {}]
  %s3 = inlined_call_operand.hbm [shape: f32[16,32], index: 3, kind: output, shape index: {}]
  %s4 = sld [smem:[#allocation0]]
  $region34: #{tpu_custom_call.1} parent=0
    _
  %s6 = ssub.s32 1, %s4
  %s7 = scalar_select 0, %s6, %s4
  $region1: #{tpu_custom_call.1} parent=0
    #allocation2 [shape = 'u8[4096]{0}', space=vmem, size = 0x1000, scoped, tag = 'input window, operand 0, single buffered']
    #allocation3 [shape = 's32[1]{0}', space=sflag, size = 0x4, scoped, tag = 'scoped memory for tpu_custom_call.1']
    #allocation4 [shape = 's32[1]{0}', space=sflag, size = 0x4, scoped, tag = 'scoped memory for tpu_custom_call.1']
    #allocation5 [shape = 'u8[16384]{0}', space=vmem, size = 0x4000, scoped, tag = 'input window, operand 1, single buffered']
    #allocation6 [shape = 's32[1]{0}', space=sflag, size = 0x4, scoped, tag = 'scoped memory for tpu_custom_call.1']
    #allocation7 [shape = 'u8[32768]{0}', space=vmem, size = 0x8000, scoped, tag = 'input window, operand 2, single buffered']
    #allocation8 [shape = 'u8[8192]{0}', space=vmem, size = 0x2000, scoped, tag = 'output window, operand 0, single buffered']
    %8 = vsyncpa [#allocation3], 0
    %9 = vsyncpa [#allocation6], 0
    %10 = vsyncpa [#allocation4], 0
    // Predicated region
    $region2: #{tpu_custom_call.1} parent=1 // pred_check
      _
    $region3: #{tpu_custom_call.1} parent=1 // pred_check_branch
      %12 = sbr.rel (0) target = $region5
    $region4: #{tpu_custom_call.1} parent=1 // pred_region
      %s14 = ssub.s32 128, 128
      %15 = vsyncadd [#allocation3], %s14
      %s16 = sshll.u32 [#allocation2], 4
      %s17 = int_to_ptr.vmem [resolvable:$true] %s16
      %22 = dma.hbm_to_vmem [thread:$0]  %s0, 128, %s17, [#allocation3], 64, 64, 4
    $region5: #{tpu_custom_call.1} parent=1 // pred_fallthru
      _
    // Predicated region
    $region6: #{tpu_custom_call.1} parent=1 // pred_check
      _
    $region7: #{tpu_custom_call.1} parent=1 // pred_check_branch
      %24 = sbr.rel (0) target = $region9
    $region8: #{tpu_custom_call.1} parent=1 // pred_region
      %s26 = ssub.s32 512, 512
      %27 = vsyncadd [#allocation6], %s26
      %s28 = sshll.u32 [#allocation5], 4
      %s29 = int_to_ptr.vmem [resolvable:$true] %s28
      %34 = dma.hbm_to_vmem [thread:$0]  %s1, 512, %s29, [#allocation6], 128, 128, 8
    $region9: #{tpu_custom_call.1} parent=1 // pred_fallthru
      _
    // Predicated region
    $region10: #{tpu_custom_call.1} parent=1 // pred_check
      _
    $region11: #{tpu_custom_call.1} parent=1 // pred_check_branch
      %36 = sbr.rel (0) target = $region13
    $region12: #{tpu_custom_call.1} parent=1 // pred_region
      %s38 = ssub.s32 1024, 1024
      %39 = vsyncadd [#allocation6], %s38
      %s40 = sshll.u32 [#allocation7], 4
      %s41 = int_to_ptr.vmem [resolvable:$true] %s40
      %46 = dma.hbm_to_vmem [thread:$0]  %s2, 1024, %s41, [#allocation6], 64, 64, 4
    $region13: #{tpu_custom_call.1} parent=1 // pred_fallthru
      _
    // Predicated region
    $region14: #{tpu_custom_call.1} parent=1 // pred_check
      _
    $region15: #{tpu_custom_call.1} parent=1 // pred_check_branch
      %48 = sbr.rel (0) target = $region17
    $region16: #{tpu_custom_call.1} parent=1 // pred_region
      %49 = dma.done [#allocation3], 128
    $region17: #{tpu_custom_call.1} parent=1 // pred_fallthru
      _
    // Predicated region
    $region18: #{tpu_custom_call.1} parent=1 // pred_check
      _
    $region19: #{tpu_custom_call.1} parent=1 // pred_check_branch
      %51 = sbr.rel (0) target = $region21
    $region20: #{tpu_custom_call.1} parent=1 // pred_region
      %52 = dma.done [#allocation6], 512
    $region21: #{tpu_custom_call.1} parent=1 // pred_fallthru
      _
    // Predicated region
    $region22: #{tpu_custom_call.1} parent=1 // pred_check
      _
    $region23: #{tpu_custom_call.1} parent=1 // pred_check_branch
      %54 = sbr.rel (0) target = $region25
    $region24: #{tpu_custom_call.1} parent=1 // pred_region
      %55 = dma.done [#allocation6], 1024
    $region25: #{tpu_custom_call.1} parent=1 // pred_fallthru
      _
    %v57 = vld [vmem:[#allocation2] sm:$0xf]
    %v58 = vld [vmem:[#allocation2 + $0x4] sm:$0xf]
    %v59 = vld [vmem:[#allocation7] sm:$0xf]
    %v60 = vld [vmem:[#allocation7 + $0x4] sm:$0xf]
    %v61 = vld [vmem:[#allocation7 + $0x8] sm:$0xf]
    %v62 = vld [vmem:[#allocation7 + $0xc] sm:$0xf]
    %v63 = vld [vmem:[#allocation7 + $0x10] sm:$0xf]
    %v64 = vld [vmem:[#allocation7 + $0x14] sm:$0xf]
    %v65 = vld [vmem:[#allocation7 + $0x18] sm:$0xf]
    %v66 = vld [vmem:[#allocation7 + $0x1c] sm:$0xf]
    %v67 = vld [vmem:[#allocation7 + $0x20] sm:$0xf]
    %v68 = vld [vmem:[#allocation7 + $0x24] sm:$0xf]
    %v69 = vld [vmem:[#allocation7 + $0x28] sm:$0xf]
    %v70 = vld [vmem:[#allocation7 + $0x2c] sm:$0xf]
    %v71 = vld [vmem:[#allocation7 + $0x30] sm:$0xf]
    %v72 = vld [vmem:[#allocation7 + $0x34] sm:$0xf]
    %v73 = vld [vmem:[#allocation7 + $0x38] sm:$0xf]
    %v74 = vld [vmem:[#allocation7 + $0x3c] sm:$0xf]
    %v77 = vunpack.c.l.b16 %v57
    %v78 = vunpack.c.l.b16 %v58
    %v79 = vpack.c.b16 %v78, %v77
    %v84 = vunpack.c.l.b16 %v59
    %v85 = vunpack.c.l.b16 %v60
    %v86 = vunpack.c.l.b16 %v61
    %v87 = vunpack.c.l.b16 %v62
    %v88 = vpack.c.b16 %v85, %v84
    %v89 = vpack.c.b16 %v87, %v86
    %vm92 = vcmask 261120
    %v94 = vsel %vm92, %v79, 0
    %96 = vmatprep.subr.bf16.mxu0 0
    %97 = vmatpush1.bf16.msra.mxu0 %v88
    %98 = vmatprep.subr.bf16.mxu0 0
    %99 = vmatpush1.bf16.msra.mxu0 %v89
    %100 = vmatprep.subr.bf16.mxu0 0
    %101 = vmatpush1.bf16.msra.mxu0 0
    %102 = vmatprep.subr.bf16.mxu0 0
    %103 = vmatpush1.bf16.msra.mxu0 0
    %104 = vmatprep.subr.bf16.mxu0 0
    %105 = vmatpush1.bf16.msra.mxu0 0
    %106 = vmatprep.subr.bf16.mxu0 0
    %107 = vmatpush1.bf16.msra.mxu0 0
    %108 = vmatprep.subr.bf16.mxu0 0
    %109 = vmatpush1.bf16.msra.mxu0 0
    %110 = vmatprep.subr.bf16.mxu0 0
    %111 = vmatpush1.bf16.msra.mxu0 0
    %112 = vmatprep.subr.bf16.mxu0 0
    %113 = vmatpush1.bf16.msra.mxu0 0
    %114 = vmatprep.subr.bf16.mxu0 0
    %115 = vmatpush1.bf16.msra.mxu0 0
    %116 = vmatprep.subr.bf16.mxu0 0
    %117 = vmatpush1.bf16.msra.mxu0 0
    %118 = vmatprep.subr.bf16.mxu0 0
    %119 = vmatpush1.bf16.msra.mxu0 0
    %120 = vmatprep.subr.bf16.mxu0 0
    %121 = vmatpush1.bf16.msra.mxu0 0
    %122 = vmatprep.subr.bf16.mxu0 0
    %123 = vmatpush1.bf16.msra.mxu0 0
    %124 = vmatprep.subr.bf16.mxu0 0
    %125 = vmatpush1.bf16.msra.mxu0 0
    %126 = vmatprep.subr.bf16.mxu0 0
    %127 = vmatpush1.bf16.msra.mxu0 0
    %128 = vmatprep.mubr.bf16.mxu0 0
    %129 = vmatmul.mubr.bf16.gmra.mrb[0].mxu0 %v94
    %v130 = vpop.f32.mrb[0].mxu0
    %v131 = vadd.f32 0.0, %v130
    %v132 = vpop.f32.mrb[0].mxu0
    %v133 = vpop.f32.mrb[0].mxu0
    %v134 = vadd.f32 0.0, %v133
    %v135 = vpop.f32.mrb[0].mxu0
    %136 = vdwg.mxu0
    %v137 = vmul.f32 %v131, %v131
    %v138 = vmul.f32 %v134, %v134
    %vm139 = vcmask 130048
    %v140 = vsel %vm139, %v137, 0.0
    %141 = vadd.xlane.f32.xlu0 %v140
    %v142 = vpop.xlane.xlu0 %141
    %v143 = vsel %vm139, %v138, 0.0
    %144 = vadd.xlane.f32.xlu0 %v143
    %v145 = vpop.xlane.xlu0 %144
    %v146 = vrcp.pop 16.0
    %v147 = vmul.f32 %v142, %v146
    %v148 = vmul.f32 %v145, %v146
    %v149 = vadd.f32 %v147, 1e-06
    %v150 = vadd.f32 %v148, 1e-06
    %v151 = vrsqrt.pop %v149
    %v152 = vrsqrt.pop %v150
    %v153 = vmul.f32 %v131, %v151
    %v154 = vmul.f32 %v134, %v152
    %v155 = vpack.c.bf16 %v154, %v153
    %v158 = vunpack.c.l.b16 %v63
    %v159 = vunpack.c.l.b16 %v64
    %v160 = vpack.c.b16 %v159, %v158
    %v163 = vsel %vm139, %v155, 0
    %165 = vmatprep.subr.bf16.mxu0 0
    %166 = vmatpush1.bf16.msra.mxu0 %v160
    %167 = vmatprep.subr.bf16.mxu0 0
    %168 = vmatpush1.bf16.msra.mxu0 0
    %169 = vmatprep.subr.bf16.mxu0 0
    %170 = vmatpush1.bf16.msra.mxu0 0
    %171 = vmatprep.subr.bf16.mxu0 0
    %172 = vmatpush1.bf16.msra.mxu0 0
    %173 = vmatprep.subr.bf16.mxu0 0
    %174 = vmatpush1.bf16.msra.mxu0 0
    %175 = vmatprep.subr.bf16.mxu0 0
    %176 = vmatpush1.bf16.msra.mxu0 0
    %177 = vmatprep.subr.bf16.mxu0 0
    %178 = vmatpush1.bf16.msra.mxu0 0
    %179 = vmatprep.subr.bf16.mxu0 0
    %180 = vmatpush1.bf16.msra.mxu0 0
    %181 = vmatprep.subr.bf16.mxu0 0
    %182 = vmatpush1.bf16.msra.mxu0 0
    %183 = vmatprep.subr.bf16.mxu0 0
    %184 = vmatpush1.bf16.msra.mxu0 0
    %185 = vmatprep.subr.bf16.mxu0 0
    %186 = vmatpush1.bf16.msra.mxu0 0
    %187 = vmatprep.subr.bf16.mxu0 0
    %188 = vmatpush1.bf16.msra.mxu0 0
    %189 = vmatprep.subr.bf16.mxu0 0
    %190 = vmatpush1.bf16.msra.mxu0 0
    %191 = vmatprep.subr.bf16.mxu0 0
    %192 = vmatpush1.bf16.msra.mxu0 0
    %193 = vmatprep.subr.bf16.mxu0 0
    %194 = vmatpush1.bf16.msra.mxu0 0
    %195 = vmatprep.subr.bf16.mxu0 0
    %196 = vmatpush1.bf16.msra.mxu0 0
    %197 = vmatprep.mubr.bf16.mxu0 0
    %198 = vmatmul.mubr.bf16.gmra.mrb[0].mxu0 %v163
    %v199 = vpop.f32.mrb[0].mxu0
    %v200 = vadd.f32 0.0, %v199
    %v201 = vpop.f32.mrb[0].mxu0
    %v202 = vpop.f32.mrb[0].mxu0
    %v203 = vadd.f32 0.0, %v202
    %v204 = vpop.f32.mrb[0].mxu0
    %205 = vdwg.mxu0
    %v206 = vmul.f32 %v200, 0.20412415
    %v207 = vmul.f32 %v203, 0.20412415
    %v208 = vpack.c.bf16 %v207, %v206
    %v213 = vunpack.c.l.b16 %v65
    %v214 = vunpack.c.l.b16 %v66
    %v215 = vunpack.c.l.b16 %v67
    %v216 = vunpack.c.l.b16 %v68
    %v217 = vpack.c.b16 %v214, %v213
    %v218 = vpack.c.b16 %v216, %v215
    %221 = vmatprep.subr.bf16.mxu0 0
    %222 = vmatpush1.bf16.msra.mxu0 %v217
    %223 = vmatprep.subr.bf16.mxu0 0
    %224 = vmatpush1.bf16.msra.mxu0 %v218
    %225 = vmatprep.subr.bf16.mxu0 0
    %226 = vmatpush1.bf16.msra.mxu0 0
    %227 = vmatprep.subr.bf16.mxu0 0
    %228 = vmatpush1.bf16.msra.mxu0 0
    %229 = vmatprep.subr.bf16.mxu0 0
    %230 = vmatpush1.bf16.msra.mxu0 0
    %231 = vmatprep.subr.bf16.mxu0 0
    %232 = vmatpush1.bf16.msra.mxu0 0
    %233 = vmatprep.subr.bf16.mxu0 0
    %234 = vmatpush1.bf16.msra.mxu0 0
    %235 = vmatprep.subr.bf16.mxu0 0
    %236 = vmatpush1.bf16.msra.mxu0 0
    %237 = vmatprep.subr.bf16.mxu0 0
    %238 = vmatpush1.bf16.msra.mxu0 0
    %239 = vmatprep.subr.bf16.mxu0 0
    %240 = vmatpush1.bf16.msra.mxu0 0
    %241 = vmatprep.subr.bf16.mxu0 0
    %242 = vmatpush1.bf16.msra.mxu0 0
    %243 = vmatprep.subr.bf16.mxu0 0
    %244 = vmatpush1.bf16.msra.mxu0 0
    %245 = vmatprep.subr.bf16.mxu0 0
    %246 = vmatpush1.bf16.msra.mxu0 0
    %247 = vmatprep.subr.bf16.mxu0 0
    %248 = vmatpush1.bf16.msra.mxu0 0
    %249 = vmatprep.subr.bf16.mxu0 0
    %250 = vmatpush1.bf16.msra.mxu0 0
    %251 = vmatprep.subr.bf16.mxu0 0
    %252 = vmatpush1.bf16.msra.mxu0 0
    %253 = vmatprep.mubr.bf16.mxu0 0
    %254 = vmatmul.mubr.bf16.gmra.mrb[0].mxu0 %v94
    %v255 = vpop.f32.mrb[0].mxu0
    %v256 = vadd.f32 0.0, %v255
    %v257 = vpop.f32.mrb[0].mxu0
    %v258 = vpop.f32.mrb[0].mxu0
    %v259 = vadd.f32 0.0, %v258
    %v260 = vpop.f32.mrb[0].mxu0
    %261 = vdwg.mxu0
    %v262 = vmul.f32 %v256, %v256
    %v263 = vmul.f32 %v259, %v259
    %v264 = vsel %vm139, %v262, 0.0
    %265 = vadd.xlane.f32.xlu0 %v264
    %v266 = vpop.xlane.xlu0 %265
    %v267 = vsel %vm139, %v263, 0.0
    %268 = vadd.xlane.f32.xlu0 %v267
    %v269 = vpop.xlane.xlu0 %268
    %v270 = vmul.f32 %v266, %v146
    %v271 = vmul.f32 %v269, %v146
    %v272 = vadd.f32 %v270, 1e-06
    %v273 = vadd.f32 %v271, 1e-06
    %v274 = vrsqrt.pop %v272
    %v275 = vrsqrt.pop %v273
    %v276 = vmul.f32 %v256, %v274
    %v277 = vmul.f32 %v259, %v275
    %v278 = vpack.c.bf16 %v277, %v276
    %v279 = vpack.c.bf16 %v259, %v256
    %v282 = vunpack.c.l.b16 %v69
    %v283 = vunpack.c.l.b16 %v70
    %v284 = vpack.c.b16 %v283, %v282
    %v287 = vsel %vm139, %v278, 0
    %289 = vmatprep.subr.bf16.mxu0 0
    %290 = vmatpush1.bf16.msra.mxu0 %v284
    %291 = vmatprep.subr.bf16.mxu0 0
    %292 = vmatpush1.bf16.msra.mxu0 0
    %293 = vmatprep.subr.bf16.mxu0 0
    %294 = vmatpush1.bf16.msra.mxu0 0
    %295 = vmatprep.subr.bf16.mxu0 0
    %296 = vmatpush1.bf16.msra.mxu0 0
    %297 = vmatprep.subr.bf16.mxu0 0
    %298 = vmatpush1.bf16.msra.mxu0 0
    %299 = vmatprep.subr.bf16.mxu0 0
    %300 = vmatpush1.bf16.msra.mxu0 0
    %301 = vmatprep.subr.bf16.mxu0 0
    %302 = vmatpush1.bf16.msra.mxu0 0
    %303 = vmatprep.subr.bf16.mxu0 0
    %304 = vmatpush1.bf16.msra.mxu0 0
    %305 = vmatprep.subr.bf16.mxu0 0
    %306 = vmatpush1.bf16.msra.mxu0 0
    %307 = vmatprep.subr.bf16.mxu0 0
    %308 = vmatpush1.bf16.msra.mxu0 0
    %309 = vmatprep.subr.bf16.mxu0 0
    %310 = vmatpush1.bf16.msra.mxu0 0
    %311 = vmatprep.subr.bf16.mxu0 0
    %312 = vmatpush1.bf16.msra.mxu0 0
    %313 = vmatprep.subr.bf16.mxu0 0
    %314 = vmatpush1.bf16.msra.mxu0 0
    %315 = vmatprep.subr.bf16.mxu0 0
    %316 = vmatpush1.bf16.msra.mxu0 0
    %317 = vmatprep.subr.bf16.mxu0 0
    %318 = vmatpush1.bf16.msra.mxu0 0
    %319 = vmatprep.subr.bf16.mxu0 0
    %320 = vmatpush1.bf16.msra.mxu0 0
    %321 = vmatprep.mubr.bf16.mxu0 0
    %322 = vmatmul.mubr.bf16.gmra.mrb[0].mxu0 %v287
    %v323 = vpop.f32.mrb[0].mxu0
    %v324 = vadd.f32 0.0, %v323
    %v325 = vpop.f32.mrb[0].mxu0
    %v326 = vpop.f32.mrb[0].mxu0
    %v327 = vadd.f32 0.0, %v326
    %v328 = vpop.f32.mrb[0].mxu0
    %329 = vdwg.mxu0
    %v330 = vpack.c.bf16 %v327, %v324
    %v333 = vsel %vm139, %v330, %v279
    %v334 = vld [vmem:[#allocation5] sm:$0xff]
    %v335 = vld [vmem:[#allocation5 + $0x8] sm:$0xff]
    %vm336 = vcmask 195584
    %v338 = vsel %vm336, %v208, 0
    %v340 = vsel %vm336, %v333, 0
    %342 = vmatprep.subr.bf16.mxu0 0
    %343 = vmatpush1.bf16.xpose.msra.mxu0 %v340
    %344 = vmatprep.subr.bf16.mxu0 0
    %345 = vmatpush1.bf16.xpose.msra.mxu0 0
    %346 = vmatprep.subr.bf16.mxu0 0
    %347 = vmatpush1.bf16.xpose.msra.mxu0 0
    %348 = vmatprep.subr.bf16.mxu0 0
    %349 = vmatpush1.bf16.xpose.msra.mxu0 0
    %350 = vmatprep.subr.bf16.mxu0 0
    %351 = vmatpush1.bf16.xpose.msra.mxu0 0
    %352 = vmatprep.subr.bf16.mxu0 0
    %353 = vmatpush1.bf16.xpose.msra.mxu0 0
    %354 = vmatprep.subr.bf16.mxu0 0
    %355 = vmatpush1.bf16.xpose.msra.mxu0 0
    %356 = vmatprep.subr.bf16.mxu0 0
    %357 = vmatpush1.bf16.xpose.msra.mxu0 0
    %358 = vmatprep.subr.bf16.mxu0 0
    %359 = vmatpush1.bf16.xpose.msra.mxu0 0
    %360 = vmatprep.subr.bf16.mxu0 0
    %361 = vmatpush1.bf16.xpose.msra.mxu0 0
    %362 = vmatprep.subr.bf16.mxu0 0
    %363 = vmatpush1.bf16.xpose.msra.mxu0 0
    %364 = vmatprep.subr.bf16.mxu0 0
    %365 = vmatpush1.bf16.xpose.msra.mxu0 0
    %366 = vmatprep.subr.bf16.mxu0 0
    %367 = vmatpush1.bf16.xpose.msra.mxu0 0
    %368 = vmatprep.subr.bf16.mxu0 0
    %369 = vmatpush1.bf16.xpose.msra.mxu0 0
    %370 = vmatprep.subr.bf16.mxu0 0
    %371 = vmatpush1.bf16.xpose.msra.mxu0 0
    %372 = vmatprep.subr.bf16.mxu0 0
    %373 = vmatpush1.bf16.xpose.msra.mxu0 0
    %374 = vmatprep.mubr.bf16.mxu0 0
    %375 = vmatmul.mubr.bf16.gmra.mrb[0].mxu0 %v338
    %v376 = vpop.f32.mrb[0].mxu0
    %v377 = vadd.f32 %v334, %v376
    %v378 = vpop.f32.mrb[0].mxu0
    %v379 = vpop.f32.mrb[0].mxu0
    %v380 = vadd.f32 %v335, %v379
    %v381 = vpop.f32.mrb[0].mxu0
    %382 = vdwg.mxu0
    %v383 = vsel %vm139, %v377, -inf
    %384 = vmax.xlane.f32.xlu0 %v383
    %v385 = vpop.xlane.xlu0 %384
    %v386 = vsel %vm139, %v380, -inf
    %387 = vmax.xlane.f32.xlu0 %v386
    %v388 = vpop.xlane.xlu0 %387
    %v389 = vsub.f32 %v377, %v385
    %v390 = vsub.f32 %v380, %v388
    %v391 = vmul.f32 %v389, 1.442695
    %v392 = vpow.pop %v391
    %v393 = vmul.f32 %v390, 1.442695
    %v394 = vpow.pop %v393
    %v395 = vsel %vm139, %v392, 0.0
    %396 = vadd.xlane.f32.xlu0 %v395
    %v397 = vpop.xlane.xlu0 %396
    %v398 = vsel %vm139, %v394, 0.0
    %399 = vadd.xlane.f32.xlu0 %v398
    %v400 = vpop.xlane.xlu0 %399
    %v401 = vrcp.pop %v397
    %v402 = vmul.f32 %v392, %v401
    %v403 = vrcp.pop %v400
    %v404 = vmul.f32 %v394, %v403
    %v405 = vpack.c.bf16 %v404, %v402
    %407 = vrot.lane.b32.xlu0 %v330, 112
    %v408 = vpop.permute.xlu0 %407
    %v411 = vsel %vm139, %v405, 0
    %413 = vmatprep.subr.bf16.mxu0 0
    %414 = vmatpush1.bf16.msra.mxu0 %v408
    %415 = vmatprep.subr.bf16.mxu0 0
    %416 = vmatpush1.bf16.msra.mxu0 0
    %417 = vmatprep.subr.bf16.mxu0 0
    %418 = vmatpush1.bf16.msra.mxu0 0
    %419 = vmatprep.subr.bf16.mxu0 0
    %420 = vmatpush1.bf16.msra.mxu0 0
    %421 = vmatprep.subr.bf16.mxu0 0
    %422 = vmatpush1.bf16.msra.mxu0 0
    %423 = vmatprep.subr.bf16.mxu0 0
    %424 = vmatpush1.bf16.msra.mxu0 0
    %425 = vmatprep.subr.bf16.mxu0 0
    %426 = vmatpush1.bf16.msra.mxu0 0
    %427 = vmatprep.subr.bf16.mxu0 0
    %428 = vmatpush1.bf16.msra.mxu0 0
    %429 = vmatprep.subr.bf16.mxu0 0
    %430 = vmatpush1.bf16.msra.mxu0 0
    %431 = vmatprep.subr.bf16.mxu0 0
    %432 = vmatpush1.bf16.msra.mxu0 0
    %433 = vmatprep.subr.bf16.mxu0 0
    %434 = vmatpush1.bf16.msra.mxu0 0
    %435 = vmatprep.subr.bf16.mxu0 0
    %436 = vmatpush1.bf16.msra.mxu0 0
    %437 = vmatprep.subr.bf16.mxu0 0
    %438 = vmatpush1.bf16.msra.mxu0 0
    %439 = vmatprep.subr.bf16.mxu0 0
    %440 = vmatpush1.bf16.msra.mxu0 0
    %441 = vmatprep.subr.bf16.mxu0 0
    %442 = vmatpush1.bf16.msra.mxu0 0
    %443 = vmatprep.subr.bf16.mxu0 0
    %444 = vmatpush1.bf16.msra.mxu0 0
    %445 = vmatprep.mubr.bf16.mxu0 0
    %446 = vmatmul.mubr.bf16.gmra.mrb[0].mxu0 %v411
    %v447 = vpop.f32.mrb[0].mxu0
    %v448 = vadd.f32 0.0, %v447
    %v449 = vpop.f32.mrb[0].mxu0
    %v450 = vpop.f32.mrb[0].mxu0
    %v451 = vadd.f32 0.0, %v450
    %v452 = vpop.f32.mrb[0].mxu0
    %453 = vdwg.mxu0
    %v454 = vpack.c.bf16 %v451, %v448
    %455 = vrot.lane.b32.xlu0 %v330, 96
    %v456 = vpop.permute.xlu0 %455
    %v458 = vsel %vm139, %v456, %v279
    %s459 = scalar_lea.vmem [#allocation5], 16
    %v460 = vld [vmem:[%s459] sm:$0xff]
    %v461 = vld [vmem:[%s459 + $0x8] sm:$0xff]
    %463 = vrot.lane.b32.xlu0 %v208, 104
    %v464 = vpop.permute.xlu0 %463
    %v466 = vsel %vm336, %v464, 0
    %v468 = vsel %vm336, %v458, 0
    %470 = vmatprep.subr.bf16.mxu0 0
    %471 = vmatpush1.bf16.xpose.msra.mxu0 %v468
    %472 = vmatprep.subr.bf16.mxu0 0
    %473 = vmatpush1.bf16.xpose.msra.mxu0 0
    %474 = vmatprep.subr.bf16.mxu0 0
    %475 = vmatpush1.bf16.xpose.msra.mxu0 0
    %476 = vmatprep.subr.bf16.mxu0 0
    %477 = vmatpush1.bf16.xpose.msra.mxu0 0
    %478 = vmatprep.subr.bf16.mxu0 0
    %479 = vmatpush1.bf16.xpose.msra.mxu0 0
    %480 = vmatprep.subr.bf16.mxu0 0
    %481 = vmatpush1.bf16.xpose.msra.mxu0 0
    %482 = vmatprep.subr.bf16.mxu0 0
    %483 = vmatpush1.bf16.xpose.msra.mxu0 0
    %484 = vmatprep.subr.bf16.mxu0 0
    %485 = vmatpush1.bf16.xpose.msra.mxu0 0
    %486 = vmatprep.subr.bf16.mxu0 0
    %487 = vmatpush1.bf16.xpose.msra.mxu0 0
    %488 = vmatprep.subr.bf16.mxu0 0
    %489 = vmatpush1.bf16.xpose.msra.mxu0 0
    %490 = vmatprep.subr.bf16.mxu0 0
    %491 = vmatpush1.bf16.xpose.msra.mxu0 0
    %492 = vmatprep.subr.bf16.mxu0 0
    %493 = vmatpush1.bf16.xpose.msra.mxu0 0
    %494 = vmatprep.subr.bf16.mxu0 0
    %495 = vmatpush1.bf16.xpose.msra.mxu0 0
    %496 = vmatprep.subr.bf16.mxu0 0
    %497 = vmatpush1.bf16.xpose.msra.mxu0 0
    %498 = vmatprep.subr.bf16.mxu0 0
    %499 = vmatpush1.bf16.xpose.msra.mxu0 0
    %500 = vmatprep.subr.bf16.mxu0 0
    %501 = vmatpush1.bf16.xpose.msra.mxu0 0
    %502 = vmatprep.mubr.bf16.mxu0 0
    %503 = vmatmul.mubr.bf16.gmra.mrb[0].mxu0 %v466
    %v504 = vpop.f32.mrb[0].mxu0
    %v505 = vadd.f32 %v460, %v504
    %v506 = vpop.f32.mrb[0].mxu0
    %v507 = vpop.f32.mrb[0].mxu0
    %v508 = vadd.f32 %v461, %v507
    %v509 = vpop.f32.mrb[0].mxu0
    %510 = vdwg.mxu0
    %v511 = vsel %vm139, %v505, -inf
    %512 = vmax.xlane.f32.xlu0 %v511
    %v513 = vpop.xlane.xlu0 %512
    %v514 = vsel %vm139, %v508, -inf
    %515 = vmax.xlane.f32.xlu0 %v514
    %v516 = vpop.xlane.xlu0 %515
    %v517 = vsub.f32 %v505, %v513
    %v518 = vsub.f32 %v508, %v516
    %v519 = vmul.f32 %v517, 1.442695
    %v520 = vpow.pop %v519
    %v521 = vmul.f32 %v518, 1.442695
    %v522 = vpow.pop %v521
    %v523 = vsel %vm139, %v520, 0.0
    %524 = vadd.xlane.f32.xlu0 %v523
    %v525 = vpop.xlane.xlu0 %524
    %v526 = vsel %vm139, %v522, 0.0
    %527 = vadd.xlane.f32.xlu0 %v526
    %v528 = vpop.xlane.xlu0 %527
    %v529 = vrcp.pop %v525
    %v530 = vmul.f32 %v520, %v529
    %v531 = vrcp.pop %v528
    %v532 = vmul.f32 %v522, %v531
    %v533 = vpack.c.bf16 %v532, %v530
    %534 = vrot.lane.b32.xlu0 %v330, 80
    %v535 = vpop.permute.xlu0 %534
    %v538 = vsel %vm139, %v533, 0
    %540 = vmatprep.subr.bf16.mxu0 0
    %541 = vmatpush1.bf16.msra.mxu0 %v535
    %542 = vmatprep.subr.bf16.mxu0 0
    %543 = vmatpush1.bf16.msra.mxu0 0
    %544 = vmatprep.subr.bf16.mxu0 0
    %545 = vmatpush1.bf16.msra.mxu0 0
    %546 = vmatprep.subr.bf16.mxu0 0
    %547 = vmatpush1.bf16.msra.mxu0 0
    %548 = vmatprep.subr.bf16.mxu0 0
    %549 = vmatpush1.bf16.msra.mxu0 0
    %550 = vmatprep.subr.bf16.mxu0 0
    %551 = vmatpush1.bf16.msra.mxu0 0
    %552 = vmatprep.subr.bf16.mxu0 0
    %553 = vmatpush1.bf16.msra.mxu0 0
    %554 = vmatprep.subr.bf16.mxu0 0
    %555 = vmatpush1.bf16.msra.mxu0 0
    %556 = vmatprep.subr.bf16.mxu0 0
    %557 = vmatpush1.bf16.msra.mxu0 0
    %558 = vmatprep.subr.bf16.mxu0 0
    %559 = vmatpush1.bf16.msra.mxu0 0
    %560 = vmatprep.subr.bf16.mxu0 0
    %561 = vmatpush1.bf16.msra.mxu0 0
    %562 = vmatprep.subr.bf16.mxu0 0
    %563 = vmatpush1.bf16.msra.mxu0 0
    %564 = vmatprep.subr.bf16.mxu0 0
    %565 = vmatpush1.bf16.msra.mxu0 0
    %566 = vmatprep.subr.bf16.mxu0 0
    %567 = vmatpush1.bf16.msra.mxu0 0
    %568 = vmatprep.subr.bf16.mxu0 0
    %569 = vmatpush1.bf16.msra.mxu0 0
    %570 = vmatprep.subr.bf16.mxu0 0
    %571 = vmatpush1.bf16.msra.mxu0 0
    %572 = vmatprep.mubr.bf16.mxu0 0
    %573 = vmatmul.mubr.bf16.gmra.mrb[0].mxu0 %v538
    %v574 = vpop.f32.mrb[0].mxu0
    %v575 = vadd.f32 0.0, %v574
    %v576 = vpop.f32.mrb[0].mxu0
    %v577 = vpop.f32.mrb[0].mxu0
    %v578 = vadd.f32 0.0, %v577
    %v579 = vpop.f32.mrb[0].mxu0
    %580 = vdwg.mxu0
    %v581 = vpack.c.bf16 %v578, %v575
    %583 = vrot.lane.b32.xlu0 %v581, 16
    %v584 = vpop.permute.xlu0 %583
    %v587 = vsel %vm139, %v454, %v584
    %v592 = vunpack.c.l.b16 %v71
    %v593 = vunpack.c.l.b16 %v72
    %v594 = vunpack.c.l.b16 %v73
    %v595 = vunpack.c.l.b16 %v74
    %v596 = vpack.c.b16 %v593, %v592
    %v597 = vpack.c.b16 %v595, %v594
    %v600 = vsel %vm92, %v587, 0
    %602 = vmatprep.subr.bf16.mxu0 0
    %603 = vmatpush1.bf16.msra.mxu0 %v596
    %604 = vmatprep.subr.bf16.mxu0 0
    %605 = vmatpush1.bf16.msra.mxu0 %v597
    %606 = vmatprep.subr.bf16.mxu0 0
    %607 = vmatpush1.bf16.msra.mxu0 0
    %608 = vmatprep.subr.bf16.mxu0 0
    %609 = vmatpush1.bf16.msra.mxu0 0
    %610 = vmatprep.subr.bf16.mxu0 0
    %611 = vmatpush1.bf16.msra.mxu0 0
    %612 = vmatprep.subr.bf16.mxu0 0
    %613 = vmatpush1.bf16.msra.mxu0 0
    %614 = vmatprep.subr.bf16.mxu0 0
    %615 = vmatpush1.bf16.msra.mxu0 0
    %616 = vmatprep.subr.bf16.mxu0 0
    %617 = vmatpush1.bf16.msra.mxu0 0
    %618 = vmatprep.subr.bf16.mxu0 0
    %619 = vmatpush1.bf16.msra.mxu0 0
    %620 = vmatprep.subr.bf16.mxu0 0
    %621 = vmatpush1.bf16.msra.mxu0 0
    %622 = vmatprep.subr.bf16.mxu0 0
    %623 = vmatpush1.bf16.msra.mxu0 0
    %624 = vmatprep.subr.bf16.mxu0 0
    %625 = vmatpush1.bf16.msra.mxu0 0
    %626 = vmatprep.subr.bf16.mxu0 0
    %627 = vmatpush1.bf16.msra.mxu0 0
    %628 = vmatprep.subr.bf16.mxu0 0
    %629 = vmatpush1.bf16.msra.mxu0 0
    %630 = vmatprep.subr.bf16.mxu0 0
    %631 = vmatpush1.bf16.msra.mxu0 0
    %632 = vmatprep.subr.bf16.mxu0 0
    %633 = vmatpush1.bf16.msra.mxu0 0
    %634 = vmatprep.mubr.bf16.mxu0 0
    %635 = vmatmul.mubr.bf16.gmra.mrb[0].mxu0 %v600
    %v636 = vpop.f32.mrb[0].mxu0
    %v637 = vadd.f32 0.0, %v636
    %v638 = vpop.f32.mrb[0].mxu0
    %v639 = vpop.f32.mrb[0].mxu0
    %v640 = vadd.f32 0.0, %v639
    %v641 = vpop.f32.mrb[0].mxu0
    %642 = vdwg.mxu0
    %v643 = vpack.c.bf16 %v640, %v637
    %v644 = vunpack.c.l.bf16 %v643
    %v645 = vunpack.c.h.bf16 %v643
    %646 = vst.msk [vmem:[#allocation8] sm:$0xff] %vm92, %v644
    %647 = vst.msk [vmem:[#allocation8 + $0x8] sm:$0xff] %vm92, %v645
    // Predicated region
    $region26: #{tpu_custom_call.1} parent=1 // pred_check
      _
    $region27: #{tpu_custom_call.1} parent=1 // pred_check_branch
      %649 = sbr.rel (0) target = $region29
    $region28: #{tpu_custom_call.1} parent=1 // pred_region
      %s651 = ssub.s32 256, 256
      %652 = vsyncadd [#allocation4], %s651
      %s653 = sshll.u32 [#allocation8], 4
      %s654 = int_to_ptr.vmem [resolvable:$true] %s653
      %659 = dma.vmem_to_hbm [thread:$0]  %s654, 256, %s3, [#allocation4], 128, 128, 8
    $region29: #{tpu_custom_call.1} parent=1 // pred_fallthru
      _
    // Predicated region
    $region30: #{tpu_custom_call.1} parent=1 // pred_check
      _
    $region31: #{tpu_custom_call.1} parent=1 // pred_check_branch
      %661 = sbr.rel (0) target = $region33
    $region32: #{tpu_custom_call.1} parent=1 // pred_region
      %662 = dma.done [#allocation4], 256
    $region33: #{tpu_custom_call.1} parent=1 // pred_fallthru
      _
    %663 = vsyncpa [#allocation3], 1
    %664 = vsyncpa [#allocation6], 1
    %665 = vsyncpa [#allocation4], 1

</llo_original>
